<compile_context>
chip_gen: v7x
topology: tpu7x:2x2x1
jax: 0.10.0
libtpu: 0.0.40
codegen_flags: <defaults>
</compile_context>

<pallas_src>
import functools

import jax
import jax.numpy as jnp
from jax.experimental import pallas as pl
from jax.experimental.pallas import tpu as pltpu

FEATURE_SIZES = {"movieimage": 2048, "movietext": 384, "movieaudio": 128}

_VMEM = pl.BlockSpec(memory_space=pltpu.MemorySpace.VMEM)


def _leaky(x, slope):
    return jnp.where(x >= 0, x, slope * x)


# ---------------------------------------------------------------------------
# Kernel 1: batched (user, item) embedding gather in a single launch.
# one_hot(ids) @ table — exact (each row has a single 1.0), lane-dense output.
# Out-of-range ids produce an all-zero row instead of an OOB access.
# ---------------------------------------------------------------------------
def _embed_pair_kernel(uid_ref, iid_ref, utab_ref, itab_ref, uo_ref, io_ref):
    def gather(ids_ref, tab_ref):
        ids = ids_ref[...]                                           # (B, 1) int32
        b = ids.shape[0]
        v = tab_ref.shape[0]
        cols = jax.lax.broadcasted_iota(jnp.int32, (b, v), 1)
        onehot = (ids == cols).astype(tab_ref.dtype)                 # (B, V)
        return jnp.dot(onehot, tab_ref[...], preferred_element_type=jnp.float32)

    uo_ref[...] = gather(uid_ref, utab_ref)
    io_ref[...] = gather(iid_ref, itab_ref)


def embedding_lookup_pair(user_table, item_table, user_ids, item_ids):
    # TODO(synk): for production-size vocabularies (>> a few thousand rows) this
    # must become a scalar-prefetch row-gather (PrefetchScalarGridSpec with ids
    # in SMEM + per-row BlockSpec) instead of a whole-table-in-VMEM one-hot MXU
    # matmul; the one-hot trick is only appropriate at demo-scale tables.
    b_u, b_i = user_ids.shape[0], item_ids.shape[0]
    d = user_table.shape[1]
    return pl.pallas_call(
        _embed_pair_kernel,
        out_shape=(jax.ShapeDtypeStruct((b_u, d), jnp.float32),
                   jax.ShapeDtypeStruct((b_i, d), jnp.float32)),
        in_specs=[_VMEM] * 4,
        out_specs=(_VMEM, _VMEM),
    )(user_ids.reshape(-1, 1).astype(jnp.int32),
      item_ids.reshape(-1, 1).astype(jnp.int32),
      user_table, item_table)


# ---------------------------------------------------------------------------
# Kernel 2: fused graph branch — K-tiled image transform + text/audio
# transforms + 3x dense-masked GATConv (DGL semantics) + final fc, in one
# pipelined pallas_call.
# ---------------------------------------------------------------------------
def _mmgat_fused_kernel(
        x_img_ref, x_txt_ref, x_aud_ref,
        wt_img_ref, bt_img_ref, wt_txt_ref, bt_txt_ref, wt_aud_ref, bt_aud_ref,
        wg_img_ref, al_img_ref, ar_img_ref, bg_img_ref,
        wg_txt_ref, al_txt_ref, ar_txt_ref, bg_txt_ref,
        wg_aud_ref, al_aud_ref, ar_aud_ref, bg_aud_ref,
        adj_ref, wfc_ref, bfc_ref,
        o_ref, h_img_acc,
        *, num_heads, out_feats):
    f32, bf16 = jnp.float32, jnp.bfloat16
    k = pl.program_id(0)

    @pl.when(k == 0)
    def _init():
        h_img_acc[...] = jnp.zeros_like(h_img_acc)

    # K-tiled image transform (the dominant HBM stream): bf16 MXU matmul with
    # f32 accumulation in a persistent VMEM scratch; the Pallas pipeline
    # overlaps the DMA of the next (N, k_tile) x_img chunk with this step.
    h_img_acc[...] += jnp.dot(x_img_ref[...], wt_img_ref[...],
                              preferred_element_type=f32)

    @pl.when(k == pl.num_programs(0) - 1)
    def _finalize():
        # Adjacency mask, built once from the int8 adjacency and shared by every
        # head and every modality (f32 math for the softmax path).
        a = adj_ref[...].astype(f32)                                  # (N, N)
        neg_mask = jnp.where(a > 0.0, 0.0, -1e30)                     # additive
        # Zero-in-degree destinations get exactly-zero attention (DGL-style)
        # instead of the max-subtracted softmax degenerating to uniform weights.
        row_gate = jnp.where(jnp.max(a, axis=-1, keepdims=True) > 0.0, 1.0, 0.0)

        def gat(h_pre, wg_ref, al_ref, ar_ref, bg_ref):
            # h_pre: (N, 32) f32 modality-transform pre-activation.
            h = _leaky(h_pre, 0.01).astype(bf16)
            # DGL GATConv projection as ONE lane-dense (N,32)@(32,H*F) matmul
            # (no broadcast_to / per-head 32-lane matmuls).
            wh = jnp.dot(h, wg_ref[...], preferred_element_type=f32)  # (N, H*F)
            al = al_ref[...]                                          # (H, F) f32
            ar = ar_ref[...]                                          # (H, F) f32
            head_outs = []
            for hh in range(num_heads):                               # static unroll
                wh_h = wh[:, hh * out_feats:(hh + 1) * out_feats]     # (N, F) f32
                er = jnp.sum(wh_h * ar[hh:hh + 1, :], axis=-1,
                             keepdims=True)                           # (N, 1) dst
                el = jnp.sum(wh_h * al[hh:hh + 1, :], axis=-1,
                             keepdims=True)                           # (N, 1) src
                e = _leaky(er + jnp.transpose(el), 0.2) + neg_mask    # (N, N)
                m = jnp.max(e, axis=-1, keepdims=True)
                p = jnp.exp(e - m)                                    # f32 softmax
                s = jnp.maximum(jnp.sum(p, axis=-1, keepdims=True), 1e-9)
                alpha = (p * pl.reciprocal(s, approx=True)) * row_gate
                head_outs.append(
                    jnp.dot(alpha.astype(bf16), wh_h.astype(bf16),
                            preferred_element_type=f32))              # (N, F)
            # DGL .flatten(1): heads concatenated along lanes, + GATConv bias.
            return jnp.concatenate(head_outs, axis=-1) + bg_ref[...]  # (N, H*F)

        h_img = h_img_acc[...] + bt_img_ref[...]
        h_txt = jnp.dot(x_txt_ref[...], wt_txt_ref[...],
                        preferred_element_type=f32) + bt_txt_ref[...]
        h_aud = jnp.dot(x_aud_ref[...], wt_aud_ref[...],
                        preferred_element_type=f32) + bt_aud_ref[...]

        g_img = gat(h_img, wg_img_ref, al_img_ref, ar_img_ref, bg_img_ref)
        g_txt = gat(h_txt, wg_txt_ref, al_txt_ref, ar_txt_ref, bg_txt_ref)
        g_aud = gat(h_aud, wg_aud_ref, al_aud_ref, ar_aud_ref, bg_aud_ref)

        # torch.cat((img, txt, aud), 1) @ Wfc + bfc, LeakyReLU: a single
        # lane-dense (N, 3*H*F)@(3*H*F, 128) matmul fuses the head and modality
        # reductions (no (H, N, 128) intermediates); lane-dense (N, 128) store.
        combined = jnp.concatenate([g_img, g_txt, g_aud], axis=-1)    # (N, 384)
        y = jnp.dot(combined.astype(bf16), wfc_ref[...],
                    preferred_element_type=f32) + bfc_ref[...]
        o_ref[...] = _leaky(y, 0.01)


def fused_mmgat(params, features, adj, *, num_heads=4, out_feats=32, k_tile=512):
    """One fused, K-pipelined pallas_call for the whole graph branch."""
    bf16 = jnp.bfloat16
    n = adj.shape[0]
    emb_dim = params["fc"]["w"].shape[1]
    k_img = features["movieimage"].shape[1]
    k_tile = min(k_tile, k_img)
    assert k_img % k_tile == 0, "image feature dim must be divisible by k_tile"
    num_k_steps = k_img // k_tile

    def gat_args(mod):
        g = params["gat_" + mod]
        return [g["w"].astype(bf16), g["attn_l"], g["attn_r"], g["b"]]

    # bf16 casts of the big operands happen HERE (wrapper side) so the HBM->VMEM
    # DMA bytes and VMEM residency are actually halved; small biases, attention
    # vectors, adjacency mask and softmax stay f32 (adjacency itself is int8).
    args = [
        features["movieimage"].astype(bf16),
        features["movietext"].astype(bf16),
        features["movieaudio"].astype(bf16),
        params["image_transform"]["w"].astype(bf16), params["image_transform"]["b"],
        params["text_transform"]["w"].astype(bf16), params["text_transform"]["b"],
        params["audio_transform"]["w"].astype(bf16), params["audio_transform"]["b"],
        *gat_args("movieimage"), *gat_args("movietext"), *gat_args("movieaudio"),
        adj.astype(jnp.int8),                      # 1 byte/entry adjacency
        params["fc"]["w"].astype(bf16), params["fc"]["b"],
    ]

    def _const_spec(a):
        zeros = (0,) * a.ndim
        return pl.BlockSpec(a.shape, lambda k: zeros)

    # Only x_img / wt_img are tiled (over K); everything else is a full block
    # with a constant index map, DMA'd once and kept VMEM-resident.
    tiled = {0: pl.BlockSpec((n, k_tile), lambda k: (0, k)),
             3: pl.BlockSpec((k_tile, 32), lambda k: (k, 0))}
    in_specs = [tiled[i] if i in tiled else _const_spec(a)
                for i, a in enumerate(args)]

    kernel = functools.partial(_mmgat_fused_kernel,
                               num_heads=num_heads, out_feats=out_feats)

    # TODO(synk): for large graphs (N >~ 512 on v7x) the attention must be tiled
    # over (dst, src) blocks with an online softmax, a "parallel" dst grid axis
    # (to use both v7x TensorCores) and an "arbitrary" src axis; the dense
    # single-block attention here is sized for the small demo graph.
    return pl.pallas_call(
        kernel,
        out_shape=jax.ShapeDtypeStruct((n, emb_dim), jnp.float32),
        grid=(num_k_steps,),
        in_specs=in_specs,
        out_specs=pl.BlockSpec((n, emb_dim), lambda k: (0, 0)),
        scratch_shapes=[pltpu.VMEM((n, 32), jnp.float32)],
        compiler_params=pltpu.CompilerParams(
            dimension_semantics=("arbitrary",),
            # Above the 16/32 MiB default scoped limits (v5e / v6e+v7x) while
            # staying below v7x's 64 MiB physical VMEM.
            vmem_limit_bytes=48 * 1024 * 1024),
    )(*args)


# ---------------------------------------------------------------------------
# MMGAT model (parameter container + forward glue)
# ---------------------------------------------------------------------------
def init_params(key, num_users, num_items, embedding_dim=128, num_heads=4,
                out_feats=32):
    keys = iter(jax.random.split(key, 32))
    nrm = lambda k, shape, s=0.05: (s * jax.random.normal(k, shape)).astype(jnp.float32)
    p = {
        "user_emb": nrm(next(keys), (num_users, embedding_dim), 1.0),
        "item_emb": nrm(next(keys), (num_items, embedding_dim), 1.0),
        "image_transform": {"w": nrm(next(keys), (FEATURE_SIZES["movieimage"], 32)),
                            "b": nrm(next(keys), (1, 32))},
        "text_transform": {"w": nrm(next(keys), (FEATURE_SIZES["movietext"], 32)),
                           "b": nrm(next(keys), (1, 32))},
        "audio_transform": {"w": nrm(next(keys), (FEATURE_SIZES["movieaudio"], 32)),
                            "b": nrm(next(keys), (1, 32))},
        "fc": {"w": nrm(next(keys), (out_feats * 3 * num_heads, embedding_dim)),
               "b": nrm(next(keys), (1, embedding_dim))},
    }
    # TODO(synk): the torch module's self.embeddings ModuleDict is never used in
    # forward(), so it is intentionally not materialized here.
    for mod in ("movieimage", "movietext", "movieaudio"):
        p["gat_" + mod] = {
            "w": nrm(next(keys), (32, num_heads * out_feats)),
            "attn_l": nrm(next(keys), (num_heads, out_feats)),
            "attn_r": nrm(next(keys), (num_heads, out_feats)),
            "b": nrm(next(keys), (1, num_heads * out_feats)),
        }
    return p


def mmgat_forward(params, user_ids, item_ids, adj=None, features=None, num_heads=4):
    user_emb, item_emb = embedding_lookup_pair(
        params["user_emb"], params["item_emb"], user_ids, item_ids)
    if adj is None or features is None:
        return user_emb, item_emb
    combined = fused_mmgat(params, features, adj, num_heads=num_heads, out_feats=32)
    return user_emb, item_emb, combined


# ---------------------------------------------------------------------------
# Demo
# ---------------------------------------------------------------------------
if __name__ == "__main__":
    key = jax.random.PRNGKey(0)
    k_param, k_img, k_txt, k_aud, k_uid, k_iid = jax.random.split(key, 6)

    NUM_USERS, NUM_ITEMS = 32, 48
    N_NODES, BATCH, NUM_HEADS = 16, 8, 4

    params = init_params(k_param, NUM_USERS, NUM_ITEMS, embedding_dim=128,
                         num_heads=NUM_HEADS)

    user_ids = jax.random.randint(k_uid, (BATCH,), 0, NUM_USERS, dtype=jnp.int32)
    item_ids = jax.random.randint(k_iid, (BATCH,), 0, NUM_ITEMS, dtype=jnp.int32)

    features = {
        "movieimage": jax.random.normal(k_img, (N_NODES, FEATURE_SIZES["movieimage"]),
                                        dtype=jnp.float32),
        "movietext": jax.random.normal(k_txt, (N_NODES, FEATURE_SIZES["movietext"]),
                                       dtype=jnp.float32),
        "movieaudio": jax.random.normal(k_aud, (N_NODES, FEATURE_SIZES["movieaudio"]),
                                        dtype=jnp.float32),
    }

    # Deterministic ring graph with self-loops; adj[dst, src].
    ids = jnp.arange(N_NODES)
    adj = (jnp.eye(N_NODES)
           + jnp.eye(N_NODES)[:, (ids + 1) % N_NODES]
           + jnp.eye(N_NODES)[:, (ids - 1) % N_NODES]).astype(jnp.float32)
    adj = jnp.clip(adj, 0.0, 1.0)

    user_emb, item_emb, combined = mmgat_forward(
        params, user_ids, item_ids, adj=adj, features=features, num_heads=NUM_HEADS)

    jax.block_until_ready((user_emb, item_emb, combined))
    assert user_emb.shape == (BATCH, 128)
    assert item_emb.shape == (BATCH, 128)
    assert combined.shape == (N_NODES, 128)
    assert bool(jnp.all(jnp.isfinite(user_emb)))
    assert bool(jnp.all(jnp.isfinite(item_emb)))
    assert bool(jnp.all(jnp.isfinite(combined)))
    print("KERNEL_OK")
</pallas_src>

<mosaic_0001>
module attributes {stable_mosaic.version = 11 : i64} {
  func.func @_embed_pair_kernel(%arg0: memref<8x1xi32, #tpu.memory_space<vmem>>, %arg1: memref<8x1xi32, #tpu.memory_space<vmem>>, %arg2: memref<32x128xf32, #tpu.memory_space<vmem>>, %arg3: memref<48x128xf32, #tpu.memory_space<vmem>>, %arg4: memref<8x128xf32, #tpu.memory_space<vmem>>, %arg5: memref<8x128xf32, #tpu.memory_space<vmem>>) attributes {dimension_semantics = [], scalar_prefetch = 0 : i64, scratch_operands = 0 : i64, tpu.core_type = #tpu.core_type<tc>} {
    %c0 = arith.constant 0 : index
    %c0_0 = arith.constant 0 : index
    %0 = vector.load %arg0[%c0, %c0_0] : memref<8x1xi32, #tpu.memory_space<vmem>>, vector<8x1xi32>
    %1 = tpu.iota {dimensions = array<i32: 1>} : vector<8x32xi32>
    %2 = vector.broadcast %0 : vector<8x1xi32> to vector<8x32xi32>
    %3 = arith.cmpi eq, %2, %1 : vector<8x32xi32>
    %4 = arith.extui %3 : vector<8x32xi1> to vector<8x32xi32>
    %5 = arith.sitofp %4 : vector<8x32xi32> to vector<8x32xf32>
    %c0_1 = arith.constant 0 : index
    %c0_2 = arith.constant 0 : index
    %6 = vector.load %arg2[%c0_1, %c0_2] : memref<32x128xf32, #tpu.memory_space<vmem>>, vector<32x128xf32>
    %cst = arith.constant dense<0.000000e+00> : vector<8x128xf32>
    %7 = tpu.matmul %5, %6, %cst {dimension_numbers = #tpu.dot_dimension_numbers<[1], [0], [0], [1], [0, 0, 1, 1], [], []>} : vector<8x32xf32>, vector<32x128xf32>, vector<8x128xf32> -> vector<8x128xf32>
    %c0_3 = arith.constant 0 : index
    %c0_4 = arith.constant 0 : index
    %8 = vector.load %arg4[%c0_3, %c0_4] : memref<8x128xf32, #tpu.memory_space<vmem>>, vector<8x128xf32>
    tpu.vector_store %arg4[%c0_3, %c0_4], %7 {strides = array<i32>} : memref<8x128xf32, #tpu.memory_space<vmem>>, vector<8x128xf32>,
    %c0_5 = arith.constant 0 : index
    %c0_6 = arith.constant 0 : index
    %9 = vector.load %arg1[%c0_5, %c0_6] : memref<8x1xi32, #tpu.memory_space<vmem>>, vector<8x1xi32>
    %10 = tpu.iota {dimensions = array<i32: 1>} : vector<8x48xi32>
    %11 = vector.broadcast %9 : vector<8x1xi32> to vector<8x48xi32>
    %12 = arith.cmpi eq, %11, %10 : vector<8x48xi32>
    %13 = arith.extui %12 : vector<8x48xi1> to vector<8x48xi32>
    %14 = arith.sitofp %13 : vector<8x48xi32> to vector<8x48xf32>
    %c0_7 = arith.constant 0 : index
    %c0_8 = arith.constant 0 : index
    %15 = vector.load %arg3[%c0_7, %c0_8] : memref<48x128xf32, #tpu.memory_space<vmem>>, vector<48x128xf32>
    %cst_9 = arith.constant dense<0.000000e+00> : vector<8x128xf32>
    %16 = tpu.matmul %14, %15, %cst_9 {dimension_numbers = #tpu.dot_dimension_numbers<[1], [0], [0], [1], [0, 0, 1, 1], [], []>} : vector<8x48xf32>, vector<48x128xf32>, vector<8x128xf32> -> vector<8x128xf32>
    %c0_10 = arith.constant 0 : index
    %c0_11 = arith.constant 0 : index
    %17 = vector.load %arg5[%c0_10, %c0_11] : memref<8x128xf32, #tpu.memory_space<vmem>>, vector<8x128xf32>
    tpu.vector_store %arg5[%c0_10, %c0_11], %16 {strides = array<i32>} : memref<8x128xf32, #tpu.memory_space<vmem>>, vector<8x128xf32>,
    return
  }
}

</mosaic_0001>

<llo_original>
// kernel: tpu_custom_call.1
$region0: #{tpu_custom_call.1}
  #allocation0 [shape = 'u32[]', space=smem, size = 0x4, offset = 0x4, fixed_abs, tag = 'smem constant byte address 0x4 - core index']
  #allocation1 [shape = 'u32[144,128]{1,0:T(1,128)}', space=vmem, size = 0x12000, scoped, tag = 'internal scratch']
  %s0 = inlined_call_operand.vmem [shape: s32[8,1], index: 0, kind: input, shape index: {}]
  %s1 = inlined_call_operand.vmem [shape: s32[8,1], index: 1, kind: input, shape index: {}]
  %s2 = inlined_call_operand.hbm [shape: f32[32,128], index: 2, kind: input, shape index: {}]
  %s3 = inlined_call_operand.hbm [shape: f32[48,128], index: 3, kind: input, shape index: {}]
  %s4 = inlined_call_operand.hbm [shape: f32[8,128], index: 4, kind: output, shape index: {0}]
  %s5 = inlined_call_operand.hbm [shape: f32[8,128], index: 5, kind: output, shape index: {1}]
  %6 = xla_tuple %s4, %s5
  %s7 = sld [smem:[#allocation0]]
  $region42: #{tpu_custom_call.1} parent=0
    _
  %s9 = ssub.s32 1, %s7
  %s10 = scalar_select 0, %s9, %s7
  $region1: #{tpu_custom_call.1} parent=0
    #allocation2 [shape = 'u8[16384]{0}', space=vmem, size = 0x4000, scoped, tag = 'input window, operand 2, single buffered']
    #allocation3 [shape = 's32[1]{0}', space=sflag, size = 0x4, scoped, tag = 'scoped memory for tpu_custom_call.1']
    #allocation4 [shape = 's32[1]{0}', space=sflag, size = 0x4, scoped, tag = 'scoped memory for tpu_custom_call.1']
    #allocation5 [shape = 'u8[24576]{0}', space=vmem, size = 0x6000, scoped, tag = 'input window, operand 3, single buffered']
    #allocation6 [shape = 's32[1]{0}', space=sflag, size = 0x4, scoped, tag = 'scoped memory for tpu_custom_call.1']
    #allocation7 [shape = 'u8[4096]{0}', space=vmem, size = 0x1000, scoped, tag = 'output window, operand 0, single buffered']
    #allocation8 [shape = 'u8[4096]{0}', space=vmem, size = 0x1000, scoped, tag = 'output window, operand 1, single buffered']
    #allocation9 [shape = 's32[1]{0}', space=sflag, size = 0x4, scoped, tag = 'scoped memory for tpu_custom_call.1']
    %11 = vsyncpa [#allocation3], 0
    %12 = vsyncpa [#allocation6], 0
    %13 = vsyncpa [#allocation4], 0
    %14 = vsyncpa [#allocation9], 0
    // Predicated region
    $region2: #{tpu_custom_call.1} parent=1 // pred_check
      _
    $region3: #{tpu_custom_call.1} parent=1 // pred_check_branch
      %16 = sbr.rel (0) target = $region5
    $region4: #{tpu_custom_call.1} parent=1 // pred_region
      _
    $region5: #{tpu_custom_call.1} parent=1 // pred_fallthru
      _
    // Predicated region
    $region6: #{tpu_custom_call.1} parent=1 // pred_check
      _
    $region7: #{tpu_custom_call.1} parent=1 // pred_check_branch
      %18 = sbr.rel (0) target = $region9
    $region8: #{tpu_custom_call.1} parent=1 // pred_region
      _
    $region9: #{tpu_custom_call.1} parent=1 // pred_fallthru
      _
    // Predicated region
    $region10: #{tpu_custom_call.1} parent=1 // pred_check
      _
    $region11: #{tpu_custom_call.1} parent=1 // pred_check_branch
      %20 = sbr.rel (0) target = $region13
    $region12: #{tpu_custom_call.1} parent=1 // pred_region
      %s22 = ssub.s32 512, 512
      %23 = vsyncadd [#allocation3], %s22
      %s24 = sshll.u32 [#allocation2], 4
      %s25 = int_to_ptr.vmem [resolvable:$true] %s24
      %30 = dma.hbm_to_vmem [thread:$0]  %s2, 512, %s25, [#allocation3], 128, 128, 8
    $region13: #{tpu_custom_call.1} parent=1 // pred_fallthru
      _
    // Predicated region
    $region14: #{tpu_custom_call.1} parent=1 // pred_check
      _
    $region15: #{tpu_custom_call.1} parent=1 // pred_check_branch
      %32 = sbr.rel (0) target = $region17
    $region16: #{tpu_custom_call.1} parent=1 // pred_region
      %s34 = ssub.s32 768, 768
      %35 = vsyncadd [#allocation6], %s34
      %s36 = sshll.u32 [#allocation5], 4
      %s37 = int_to_ptr.vmem [resolvable:$true] %s36
      %42 = dma.hbm_to_vmem [thread:$0]  %s3, 768, %s37, [#allocation6], 128, 128, 8
    $region17: #{tpu_custom_call.1} parent=1 // pred_fallthru
      _
    // Predicated region
    $region18: #{tpu_custom_call.1} parent=1 // pred_check
      _
    $region19: #{tpu_custom_call.1} parent=1 // pred_check_branch
      %44 = sbr.rel (0) target = $region21
    $region20: #{tpu_custom_call.1} parent=1 // pred_region
      %45 = dma.done [#allocation3], 512
    $region21: #{tpu_custom_call.1} parent=1 // pred_fallthru
      _
    // Predicated region
    $region22: #{tpu_custom_call.1} parent=1 // pred_check
      _
    $region23: #{tpu_custom_call.1} parent=1 // pred_check_branch
      %47 = sbr.rel (0) target = $region25
    $region24: #{tpu_custom_call.1} parent=1 // pred_region
      %48 = dma.done [#allocation6], 768
    $region25: #{tpu_custom_call.1} parent=1 // pred_fallthru
      _
    %v49 = vld [vmem:[%s0] sm:$0xff]
    %v50 = vlaneseq
    %v51 = vand.u32 %v50, 127
    %52 = vset.pattern.permute.xlu0 0
    %53 = vperm.xlu0 %52, %v49
    %v54 = vpop.permute.xlu0 %53
    %vm55 = vcmp.eq.s32.totalorder %v54, %v51
    %v56 = vsel %vm55, 1, 0
    %v57 = vcvt.s32.f32 %v56
    %v58 = vld [vmem:[#allocation2] sm:$0xff]
    %v59 = vld [vmem:[#allocation2 + $0x8] sm:$0xff]
    %v60 = vld [vmem:[#allocation2 + $0x10] sm:$0xff]
    %v61 = vld [vmem:[#allocation2 + $0x18] sm:$0xff]
    %vm62 = vcmask 261120
    %v64 = vsel %vm62, %v57, 0
    %66 = vmatprep.subr.mxu0 0.0
    %67 = vmatpush1.msra.mxu0 %v58
    %68 = vmatprep.subr.mxu0 0.0
    %69 = vmatpush1.msra.mxu0 %v59
    %70 = vmatprep.subr.mxu0 0.0
    %71 = vmatpush1.msra.mxu0 %v60
    %72 = vmatprep.subr.mxu0 0.0
    %73 = vmatpush1.msra.mxu0 %v61
    %74 = vmatprep.subr.mxu0 0.0
    %75 = vmatpush1.msra.mxu0 0.0
    %76 = vmatprep.subr.mxu0 0.0
    %77 = vmatpush1.msra.mxu0 0.0
    %78 = vmatprep.subr.mxu0 0.0
    %79 = vmatpush1.msra.mxu0 0.0
    %80 = vmatprep.subr.mxu0 0.0
    %81 = vmatpush1.msra.mxu0 0.0
    %82 = vmatprep.subr.mxu0 0.0
    %83 = vmatpush1.msra.mxu0 0.0
    %84 = vmatprep.subr.mxu0 0.0
    %85 = vmatpush1.msra.mxu0 0.0
    %86 = vmatprep.subr.mxu0 0.0
    %87 = vmatpush1.msra.mxu0 0.0
    %88 = vmatprep.subr.mxu0 0.0
    %89 = vmatpush1.msra.mxu0 0.0
    %90 = vmatprep.subr.mxu0 0.0
    %91 = vmatpush1.msra.mxu0 0.0
    %92 = vmatprep.subr.mxu0 0.0
    %93 = vmatpush1.msra.mxu0 0.0
    %94 = vmatprep.subr.mxu0 0.0
    %95 = vmatpush1.msra.mxu0 0.0
    %96 = vmatprep.subr.mxu0 0.0
    %97 = vmatpush1.msra.mxu0 0.0
    %98 = vmatprep.subr.mxu0 0.0
    %99 = vmatpush1.msra.mxu0 0.0
    %100 = vmatprep.subr.mxu0 0.0
    %101 = vmatpush1.msra.mxu0 0.0
    %102 = vmatprep.subr.mxu0 0.0
    %103 = vmatpush1.msra.mxu0 0.0
    %104 = vmatprep.subr.mxu0 0.0
    %105 = vmatpush1.msra.mxu0 0.0
    %106 = vmatprep.subr.mxu0 0.0
    %107 = vmatpush1.msra.mxu0 0.0
    %108 = vmatprep.subr.mxu0 0.0
    %109 = vmatpush1.msra.mxu0 0.0
    %110 = vmatprep.subr.mxu0 0.0
    %111 = vmatpush1.msra.mxu0 0.0
    %112 = vmatprep.subr.mxu0 0.0
    %113 = vmatpush1.msra.mxu0 0.0
    %114 = vmatprep.subr.mxu0 0.0
    %115 = vmatpush1.msra.mxu0 0.0
    %116 = vmatprep.subr.mxu0 0.0
    %117 = vmatpush1.msra.mxu0 0.0
    %118 = vmatprep.subr.mxu0 0.0
    %119 = vmatpush1.msra.mxu0 0.0
    %120 = vmatprep.subr.mxu0 0.0
    %121 = vmatpush1.msra.mxu0 0.0
    %122 = vmatprep.subr.mxu0 0.0
    %123 = vmatpush1.msra.mxu0 0.0
    %124 = vmatprep.subr.mxu0 0.0
    %125 = vmatpush1.msra.mxu0 0.0
    %126 = vmatprep.subr.mxu0 0.0
    %127 = vmatpush1.msra.mxu0 0.0
    %128 = vmatprep.subr.mxu0 0.0
    %129 = vmatpush1.msra.mxu0 0.0
    %130 = vmatprep.mubr.f32.mxu0 0.0
    %131 = vmatmul.mubr.f32.gmra.mrb[0].mxu0 %v64
    %v132 = vpop.f32.mrb[0].mxu0
    %v133 = vadd.f32 0.0, %v132
    %v134 = vpop.f32.mrb[0].mxu0
    %135 = vdwg.mxu0
    %136 = vst [vmem:[#allocation7] sm:$0xff] %v133
    %v137 = vld [vmem:[%s1] sm:$0xff]
    %138 = vset.pattern.permute.xlu0 0
    %139 = vperm.xlu0 %138, %v137
    %v140 = vpop.permute.xlu0 %139
    %vm141 = vcmp.eq.s32.totalorder %v140, %v51
    %v142 = vsel %vm141, 1, 0
    %v143 = vcvt.s32.f32 %v142
    %v144 = vld [vmem:[#allocation5] sm:$0xff]
    %v145 = vld [vmem:[#allocation5 + $0x8] sm:$0xff]
    %v146 = vld [vmem:[#allocation5 + $0x10] sm:$0xff]
    %v147 = vld [vmem:[#allocation5 + $0x18] sm:$0xff]
    %v148 = vld [vmem:[#allocation5 + $0x20] sm:$0xff]
    %v149 = vld [vmem:[#allocation5 + $0x28] sm:$0xff]
    %vm150 = vcmask 392192
    %v152 = vsel %vm150, %v143, 0
    %154 = vmatprep.subr.mxu0 0.0
    %155 = vmatpush1.msra.mxu0 %v144
    %156 = vmatprep.subr.mxu0 0.0
    %157 = vmatpush1.msra.mxu0 %v145
    %158 = vmatprep.subr.mxu0 0.0
    %159 = vmatpush1.msra.mxu0 %v146
    %160 = vmatprep.subr.mxu0 0.0
    %161 = vmatpush1.msra.mxu0 %v147
    %162 = vmatprep.subr.mxu0 0.0
    %163 = vmatpush1.msra.mxu0 %v148
    %164 = vmatprep.subr.mxu0 0.0
    %165 = vmatpush1.msra.mxu0 %v149
    %166 = vmatprep.subr.mxu0 0.0
    %167 = vmatpush1.msra.mxu0 0.0
    %168 = vmatprep.subr.mxu0 0.0
    %169 = vmatpush1.msra.mxu0 0.0
    %170 = vmatprep.subr.mxu0 0.0
    %171 = vmatpush1.msra.mxu0 0.0
    %172 = vmatprep.subr.mxu0 0.0
    %173 = vmatpush1.msra.mxu0 0.0
    %174 = vmatprep.subr.mxu0 0.0
    %175 = vmatpush1.msra.mxu0 0.0
    %176 = vmatprep.subr.mxu0 0.0
    %177 = vmatpush1.msra.mxu0 0.0
    %178 = vmatprep.subr.mxu0 0.0
    %179 = vmatpush1.msra.mxu0 0.0
    %180 = vmatprep.subr.mxu0 0.0
    %181 = vmatpush1.msra.mxu0 0.0
    %182 = vmatprep.subr.mxu0 0.0
    %183 = vmatpush1.msra.mxu0 0.0
    %184 = vmatprep.subr.mxu0 0.0
    %185 = vmatpush1.msra.mxu0 0.0
    %186 = vmatprep.subr.mxu0 0.0
    %187 = vmatpush1.msra.mxu0 0.0
    %188 = vmatprep.subr.mxu0 0.0
    %189 = vmatpush1.msra.mxu0 0.0
    %190 = vmatprep.subr.mxu0 0.0
    %191 = vmatpush1.msra.mxu0 0.0
    %192 = vmatprep.subr.mxu0 0.0
    %193 = vmatpush1.msra.mxu0 0.0
    %194 = vmatprep.subr.mxu0 0.0
    %195 = vmatpush1.msra.mxu0 0.0
    %196 = vmatprep.subr.mxu0 0.0
    %197 = vmatpush1.msra.mxu0 0.0
    %198 = vmatprep.subr.mxu0 0.0
    %199 = vmatpush1.msra.mxu0 0.0
    %200 = vmatprep.subr.mxu0 0.0
    %201 = vmatpush1.msra.mxu0 0.0
    %202 = vmatprep.subr.mxu0 0.0
    %203 = vmatpush1.msra.mxu0 0.0
    %204 = vmatprep.subr.mxu0 0.0
    %205 = vmatpush1.msra.mxu0 0.0
    %206 = vmatprep.subr.mxu0 0.0
    %207 = vmatpush1.msra.mxu0 0.0
    %208 = vmatprep.subr.mxu0 0.0
    %209 = vmatpush1.msra.mxu0 0.0
    %210 = vmatprep.subr.mxu0 0.0
    %211 = vmatpush1.msra.mxu0 0.0
    %212 = vmatprep.subr.mxu0 0.0
    %213 = vmatpush1.msra.mxu0 0.0
    %214 = vmatprep.subr.mxu0 0.0
    %215 = vmatpush1.msra.mxu0 0.0
    %216 = vmatprep.subr.mxu0 0.0
    %217 = vmatpush1.msra.mxu0 0.0
    %218 = vmatprep.mubr.f32.mxu0 0.0
    %219 = vmatmul.mubr.f32.gmra.mrb[0].mxu0 %v152
    %v220 = vpop.f32.mrb[0].mxu0
    %v221 = vadd.f32 0.0, %v220
    %v222 = vpop.f32.mrb[0].mxu0
    %223 = vdwg.mxu0
    %224 = vst [vmem:[#allocation8] sm:$0xff] %v221
    // Predicated region
    $region26: #{tpu_custom_call.1} parent=1 // pred_check
      _
    $region27: #{tpu_custom_call.1} parent=1 // pred_check_branch
      %226 = sbr.rel (0) target = $region29
    $region28: #{tpu_custom_call.1} parent=1 // pred_region
      %s228 = ssub.s32 128, 128
      %229 = vsyncadd [#allocation4], %s228
      %s231 = sshll.u32 [#allocation7], 4
      %s232 = int_to_ptr.vmem [resolvable:$true] %s231
      %234 = dma.vmem_to_hbm [thread:$0]  %s232, 128, %s4, [#allocation4]
    $region29: #{tpu_custom_call.1} parent=1 // pred_fallthru
      _
    // Predicated region
    $region30: #{tpu_custom_call.1} parent=1 // pred_check
      _
    $region31: #{tpu_custom_call.1} parent=1 // pred_check_branch
      %236 = sbr.rel (0) target = $region33
    $region32: #{tpu_custom_call.1} parent=1 // pred_region
      %s238 = ssub.s32 128, 128
      %239 = vsyncadd [#allocation9], %s238
      %s241 = sshll.u32 [#allocation8], 4
      %s242 = int_to_ptr.vmem [resolvable:$true] %s241
      %244 = dma.vmem_to_hbm [thread:$0]  %s242, 128, %s5, [#allocation9]
    $region33: #{tpu_custom_call.1} parent=1 // pred_fallthru
      _
    // Predicated region
    $region34: #{tpu_custom_call.1} parent=1 // pred_check
      _
    $region35: #{tpu_custom_call.1} parent=1 // pred_check_branch
      %246 = sbr.rel (0) target = $region37
    $region36: #{tpu_custom_call.1} parent=1 // pred_region
      %247 = dma.done [#allocation4], 128
    $region37: #{tpu_custom_call.1} parent=1 // pred_fallthru
      _
    // Predicated region
    $region38: #{tpu_custom_call.1} parent=1 // pred_check
      _
    $region39: #{tpu_custom_call.1} parent=1 // pred_check_branch
      %249 = sbr.rel (0) target = $region41
    $region40: #{tpu_custom_call.1} parent=1 // pred_region
      %250 = dma.done [#allocation9], 128
    $region41: #{tpu_custom_call.1} parent=1 // pred_fallthru
      _
    %251 = vsyncpa [#allocation3], 1
    %252 = vsyncpa [#allocation6], 1
    %253 = vsyncpa [#allocation4], 1
    %254 = vsyncpa [#allocation9], 1

</llo_original>
